<compile_context>
chip_gen: v7x
topology: tpu7x:2x2x1
jax: 0.10.0
libtpu: 0.0.40
codegen_flags: <defaults>
</compile_context>

<pallas_src>
import math

import jax
import jax.numpy as jnp
from jax.experimental import pallas as pl
from jax.experimental.pallas import tpu as pltpu

SELU_ALPHA = 1.6732632423543772
SELU_SCALE = 1.0507009873554805
BN_EPS = 1e-5

# Param-slab row layout (width 256, unused lanes are zero):
#   rows 0,1,2 : b1, gamma1, beta1   (width 256)
#   rows 3,4,5 : b2, gamma2, beta2   (width 128)
#   rows 6,7,8 : b3, gamma3, beta3   (width 64)
#   row  9     : classification head weight (width 64)
#   row 10     : classification head bias   (lane 0)
SLAB_ROWS = 16
SLAB_COLS = 256
LAYER_ROW0 = (0, 3, 6)
LAYER_WIDTH = (256, 128, 64)
HEAD_W_ROW = 9
HEAD_B_ROW = 10


def _selu(x):
    return SELU_SCALE * jnp.where(x > 0, x, SELU_ALPHA * (jnp.exp(x) - 1.0))


def _mlp_kernel(x_ref, w1_ref, w2_ref, w3_ref, slab_ref, out_ref):
    """Whole forward pass in one VMEM-resident kernel (all tensors are tiny)."""

    def linear_bn_selu(h, w_ref, row0, width):
        b = slab_ref[row0 + 0:row0 + 1, :width]     # (1, width)
        g = slab_ref[row0 + 1:row0 + 2, :width]     # (1, width)
        be = slab_ref[row0 + 2:row0 + 3, :width]    # (1, width)
        # Linear: h @ W + b  (W already transposed to (in, out)).
        z = jnp.dot(h, w_ref[...], preferred_element_type=jnp.float32) + b
        # BatchNorm1d (training mode): batch mean, biased batch variance.
        mean = jnp.mean(z, axis=0, keepdims=True)
        var = jnp.mean((z - mean) ** 2, axis=0, keepdims=True)
        # Fold gamma into the rsqrt scale (one (B, N) multiply saved per layer).
        scale = g * jax.lax.rsqrt(var + BN_EPS)
        zn = (z - mean) * scale + be
        return _selu(zn)

    h = linear_bn_selu(x_ref[...], w1_ref, LAYER_ROW0[0], LAYER_WIDTH[0])
    h = linear_bn_selu(h, w2_ref, LAYER_ROW0[1], LAYER_WIDTH[1])
    h = linear_bn_selu(h, w3_ref, LAYER_ROW0[2], LAYER_WIDTH[2])

    # Classification head: contract the 64-dim of h against the head weight row,
    # producing a lane-dense (1, B) output directly (no (B, 1) column store).
    wc = slab_ref[HEAD_W_ROW:HEAD_W_ROW + 1, :64]   # (1, 64)
    bc = slab_ref[HEAD_B_ROW:HEAD_B_ROW + 1, :1]    # (1, 1)
    logits = jax.lax.dot_general(
        wc, h,
        dimension_numbers=(((1,), (1,)), ((), ())),
        preferred_element_type=jnp.float32,
    ) + bc                                          # (1, B)
    out_ref[...] = jax.nn.sigmoid(logits)


@jax.jit
def mlp_forward(x, params):
    w1, w2, w3, slab = params
    B = x.shape[0]
    vmem = pl.BlockSpec(memory_space=pltpu.MemorySpace.VMEM)
    out = pl.pallas_call(
        _mlp_kernel,
        out_shape=jax.ShapeDtypeStruct((1, B), jnp.float32),
        in_specs=[vmem] * 5,
        out_specs=vmem,
    )(x, w1, w2, w3, slab)
    return out[0]  # (B,) == cls.squeeze(1)


def init_params(key, input_shape):
    """Deterministic init mirroring nn.Linear / BatchNorm1d defaults, packed."""
    layer_dims = [(input_shape, 256), (256, 128), (128, 64)]
    ws = []
    slab = jnp.zeros((SLAB_ROWS, SLAB_COLS), jnp.float32)
    for li, (fan_in, fan_out) in enumerate(layer_dims):
        key, kw, kb = jax.random.split(key, 3)
        bound = 1.0 / math.sqrt(float(fan_in))
        # torch Linear weight is (out, in); we store the transpose (in, out).
        w = jax.random.uniform(kw, (fan_in, fan_out), jnp.float32, -bound, bound)
        b = jax.random.uniform(kb, (fan_out,), jnp.float32, -bound, bound)
        ws.append(w)
        row0 = LAYER_ROW0[li]
        slab = slab.at[row0 + 0, :fan_out].set(b)    # Linear bias
        slab = slab.at[row0 + 1, :fan_out].set(1.0)  # BN gamma = 1
        # BN beta row stays 0
    # Classification head (64 -> 1).
    key, kw, kb = jax.random.split(key, 3)
    bound = 1.0 / math.sqrt(64.0)
    wc = jax.random.uniform(kw, (64,), jnp.float32, -bound, bound)
    bc = jax.random.uniform(kb, (1,), jnp.float32, -bound, bound)
    slab = slab.at[HEAD_W_ROW, :64].set(wc)
    slab = slab.at[HEAD_B_ROW, 0].set(bc[0])
    # TODO(synk): optionally cast ws to bfloat16 here for v6e/v7x MXU throughput
    # at large batch (keeps BN/SELU math in f32); left f32 for bit-close checks.
    return (ws[0], ws[1], ws[2], slab)


def reference_forward(x, params):
    """Pure-JAX reference for a sanity check (unpacks the same slab layout)."""
    w1, w2, w3, slab = params

    def block(h, w, row0, width):
        b = slab[row0 + 0, :width]
        g = slab[row0 + 1, :width]
        be = slab[row0 + 2, :width]
        z = h @ w + b
        mean = jnp.mean(z, axis=0, keepdims=True)
        var = jnp.mean((z - mean) ** 2, axis=0, keepdims=True)
        zn = (z - mean) / jnp.sqrt(var + BN_EPS) * g + be
        return _selu(zn)

    h = block(x, w1, LAYER_ROW0[0], LAYER_WIDTH[0])
    h = block(h, w2, LAYER_ROW0[1], LAYER_WIDTH[1])
    h = block(h, w3, LAYER_ROW0[2], LAYER_WIDTH[2])
    logits = h @ slab[HEAD_W_ROW, :64] + slab[HEAD_B_ROW, 0]
    return jax.nn.sigmoid(logits)  # (B,)


if __name__ == "__main__":
    key = jax.random.PRNGKey(0)
    k_x, k_p = jax.random.split(key)

    B, D_IN = 8, 32
    x = jax.random.normal(k_x, (B, D_IN), jnp.float32)
    params = init_params(k_p, D_IN)

    out = mlp_forward(x, params)
    out = jax.block_until_ready(out)

    ref = reference_forward(x, params)
    assert out.shape == (B,)
    assert jnp.allclose(out, ref, atol=1e-5, rtol=1e-5)

    print("KERNEL_OK")
</pallas_src>

<mosaic_0001>
module attributes {stable_mosaic.version = 11 : i64} {
  func.func @_mlp_kernel(%arg0: memref<8x32xf32, #tpu.memory_space<vmem>>, %arg1: memref<32x256xf32, #tpu.memory_space<vmem>>, %arg2: memref<256x128xf32, #tpu.memory_space<vmem>>, %arg3: memref<128x64xf32, #tpu.memory_space<vmem>>, %arg4: memref<16x256xf32, #tpu.memory_space<vmem>>, %arg5: memref<1x8xf32, #tpu.memory_space<vmem>>) attributes {dimension_semantics = [], scalar_prefetch = 0 : i64, scratch_operands = 0 : i64, tpu.core_type = #tpu.core_type<tc>} {
    %c0 = arith.constant 0 : index
    %c0_0 = arith.constant 0 : index
    %0 = vector.load %arg0[%c0, %c0_0] : memref<8x32xf32, #tpu.memory_space<vmem>>, vector<8x32xf32>
    %c0_1 = arith.constant 0 : index
    %c0_2 = arith.constant 0 : index
    %1 = vector.load %arg4[%c0_1, %c0_2] : memref<16x256xf32, #tpu.memory_space<vmem>>, vector<1x256xf32>
    %c1 = arith.constant 1 : index
    %c0_3 = arith.constant 0 : index
    %2 = vector.load %arg4[%c1, %c0_3] : memref<16x256xf32, #tpu.memory_space<vmem>>, vector<1x256xf32>
    %c2 = arith.constant 2 : index
    %c0_4 = arith.constant 0 : index
    %3 = vector.load %arg4[%c2, %c0_4] : memref<16x256xf32, #tpu.memory_space<vmem>>, vector<1x256xf32>
    %c0_5 = arith.constant 0 : index
    %c0_6 = arith.constant 0 : index
    %4 = vector.load %arg1[%c0_5, %c0_6] : memref<32x256xf32, #tpu.memory_space<vmem>>, vector<32x256xf32>
    %cst = arith.constant dense<0.000000e+00> : vector<8x256xf32>
    %5 = tpu.matmul %0, %4, %cst {dimension_numbers = #tpu.dot_dimension_numbers<[1], [0], [0], [1], [0, 0, 1, 1], [], []>} : vector<8x32xf32>, vector<32x256xf32>, vector<8x256xf32> -> vector<8x256xf32>
    %6 = vector.broadcast %1 : vector<1x256xf32> to vector<8x256xf32>
    %7 = arith.addf %5, %6 : vector<8x256xf32>
    %cst_7 = arith.constant dense<0.000000e+00> : vector<256xf32>
    %8 = vector.multi_reduction <add>, %7, %cst_7 [0] : vector<8x256xf32> to vector<256xf32>
    %9 = vector.shape_cast %8 : vector<256xf32> to vector<1x256xf32>
    %cst_8 = arith.constant 8.000000e+00 : f32
    %10 = vector.broadcast %cst_8 : f32 to vector<1x256xf32>
    %11 = arith.divf %9, %10 : vector<1x256xf32>
    %12 = vector.broadcast %11 : vector<1x256xf32> to vector<8x256xf32>
    %13 = arith.subf %7, %12 : vector<8x256xf32>
    %14 = arith.mulf %13, %13 : vector<8x256xf32>
    %cst_9 = arith.constant dense<0.000000e+00> : vector<256xf32>
    %15 = vector.multi_reduction <add>, %14, %cst_9 [0] : vector<8x256xf32> to vector<256xf32>
    %16 = vector.shape_cast %15 : vector<256xf32> to vector<1x256xf32>
    %cst_10 = arith.constant 8.000000e+00 : f32
    %17 = vector.broadcast %cst_10 : f32 to vector<1x256xf32>
    %18 = arith.divf %16, %17 : vector<1x256xf32>
    %cst_11 = arith.constant 9.99999974E-6 : f32
    %19 = vector.broadcast %cst_11 : f32 to vector<1x256xf32>
    %20 = arith.addf %18, %19 : vector<1x256xf32>
    %21 = math.rsqrt %20 : vector<1x256xf32>
    %22 = arith.mulf %2, %21 : vector<1x256xf32>
    %23 = vector.broadcast %11 : vector<1x256xf32> to vector<8x256xf32>
    %24 = arith.subf %7, %23 : vector<8x256xf32>
    %25 = vector.broadcast %22 : vector<1x256xf32> to vector<8x256xf32>
    %26 = arith.mulf %24, %25 : vector<8x256xf32>
    %27 = vector.broadcast %3 : vector<1x256xf32> to vector<8x256xf32>
    %28 = arith.addf %26, %27 : vector<8x256xf32>
    %cst_12 = arith.constant 0.000000e+00 : f32
    %29 = vector.broadcast %cst_12 : f32 to vector<8x256xf32>
    %30 = arith.cmpf ogt, %28, %29 : vector<8x256xf32>
    %31 = math.exp %28 : vector<8x256xf32>
    %cst_13 = arith.constant 1.000000e+00 : f32
    %32 = vector.broadcast %cst_13 : f32 to vector<8x256xf32>
    %33 = arith.subf %31, %32 : vector<8x256xf32>
    %cst_14 = arith.constant 1.67326319 : f32
    %34 = vector.broadcast %cst_14 : f32 to vector<8x256xf32>
    %35 = arith.mulf %34, %33 : vector<8x256xf32>
    %36 = arith.select %30, %28, %35 : vector<8x256xi1>, vector<8x256xf32>
    %cst_15 = arith.constant 1.05070102 : f32
    %37 = vector.broadcast %cst_15 : f32 to vector<8x256xf32>
    %38 = arith.mulf %37, %36 : vector<8x256xf32>
    %c3 = arith.constant 3 : index
    %c0_16 = arith.constant 0 : index
    %39 = vector.load %arg4[%c3, %c0_16] : memref<16x256xf32, #tpu.memory_space<vmem>>, vector<1x128xf32>
    %c4 = arith.constant 4 : index
    %c0_17 = arith.constant 0 : index
    %40 = vector.load %arg4[%c4, %c0_17] : memref<16x256xf32, #tpu.memory_space<vmem>>, vector<1x128xf32>
    %c5 = arith.constant 5 : index
    %c0_18 = arith.constant 0 : index
    %41 = vector.load %arg4[%c5, %c0_18] : memref<16x256xf32, #tpu.memory_space<vmem>>, vector<1x128xf32>
    %c0_19 = arith.constant 0 : index
    %c0_20 = arith.constant 0 : index
    %42 = vector.load %arg2[%c0_19, %c0_20] : memref<256x128xf32, #tpu.memory_space<vmem>>, vector<256x128xf32>
    %cst_21 = arith.constant dense<0.000000e+00> : vector<8x128xf32>
    %43 = tpu.matmul %38, %42, %cst_21 {dimension_numbers = #tpu.dot_dimension_numbers<[1], [0], [0], [1], [0, 0, 1, 1], [], []>} : vector<8x256xf32>, vector<256x128xf32>, vector<8x128xf32> -> vector<8x128xf32>
    %44 = vector.broadcast %39 : vector<1x128xf32> to vector<8x128xf32>
    %45 = arith.addf %43, %44 : vector<8x128xf32>
    %cst_22 = arith.constant dense<0.000000e+00> : vector<128xf32>
    %46 = vector.multi_reduction <add>, %45, %cst_22 [0] : vector<8x128xf32> to vector<128xf32>
    %47 = vector.shape_cast %46 : vector<128xf32> to vector<1x128xf32>
    %cst_23 = arith.constant 8.000000e+00 : f32
    %48 = vector.broadcast %cst_23 : f32 to vector<1x128xf32>
    %49 = arith.divf %47, %48 : vector<1x128xf32>
    %50 = vector.broadcast %49 : vector<1x128xf32> to vector<8x128xf32>
    %51 = arith.subf %45, %50 : vector<8x128xf32>
    %52 = arith.mulf %51, %51 : vector<8x128xf32>
    %cst_24 = arith.constant dense<0.000000e+00> : vector<128xf32>
    %53 = vector.multi_reduction <add>, %52, %cst_24 [0] : vector<8x128xf32> to vector<128xf32>
    %54 = vector.shape_cast %53 : vector<128xf32> to vector<1x128xf32>
    %cst_25 = arith.constant 8.000000e+00 : f32
    %55 = vector.broadcast %cst_25 : f32 to vector<1x128xf32>
    %56 = arith.divf %54, %55 : vector<1x128xf32>
    %cst_26 = arith.constant 9.99999974E-6 : f32
    %57 = vector.broadcast %cst_26 : f32 to vector<1x128xf32>
    %58 = arith.addf %56, %57 : vector<1x128xf32>
    %59 = math.rsqrt %58 : vector<1x128xf32>
    %60 = arith.mulf %40, %59 : vector<1x128xf32>
    %61 = vector.broadcast %49 : vector<1x128xf32> to vector<8x128xf32>
    %62 = arith.subf %45, %61 : vector<8x128xf32>
    %63 = vector.broadcast %60 : vector<1x128xf32> to vector<8x128xf32>
    %64 = arith.mulf %62, %63 : vector<8x128xf32>
    %65 = vector.broadcast %41 : vector<1x128xf32> to vector<8x128xf32>
    %66 = arith.addf %64, %65 : vector<8x128xf32>
    %cst_27 = arith.constant 0.000000e+00 : f32
    %67 = vector.broadcast %cst_27 : f32 to vector<8x128xf32>
    %68 = arith.cmpf ogt, %66, %67 : vector<8x128xf32>
    %69 = math.exp %66 : vector<8x128xf32>
    %cst_28 = arith.constant 1.000000e+00 : f32
    %70 = vector.broadcast %cst_28 : f32 to vector<8x128xf32>
    %71 = arith.subf %69, %70 : vector<8x128xf32>
    %cst_29 = arith.constant 1.67326319 : f32
    %72 = vector.broadcast %cst_29 : f32 to vector<8x128xf32>
    %73 = arith.mulf %72, %71 : vector<8x128xf32>
    %74 = arith.select %68, %66, %73 : vector<8x128xi1>, vector<8x128xf32>
    %cst_30 = arith.constant 1.05070102 : f32
    %75 = vector.broadcast %cst_30 : f32 to vector<8x128xf32>
    %76 = arith.mulf %75, %74 : vector<8x128xf32>
    %c6 = arith.constant 6 : index
    %c0_31 = arith.constant 0 : index
    %77 = vector.load %arg4[%c6, %c0_31] : memref<16x256xf32, #tpu.memory_space<vmem>>, vector<1x64xf32>
    %c7 = arith.constant 7 : index
    %c0_32 = arith.constant 0 : index
    %78 = vector.load %arg4[%c7, %c0_32] : memref<16x256xf32, #tpu.memory_space<vmem>>, vector<1x64xf32>
    %c8 = arith.constant 8 : index
    %c0_33 = arith.constant 0 : index
    %79 = vector.load %arg4[%c8, %c0_33] : memref<16x256xf32, #tpu.memory_space<vmem>>, vector<1x64xf32>
    %c0_34 = arith.constant 0 : index
    %c0_35 = arith.constant 0 : index
    %80 = vector.load %arg3[%c0_34, %c0_35] : memref<128x64xf32, #tpu.memory_space<vmem>>, vector<128x64xf32>
    %cst_36 = arith.constant dense<0.000000e+00> : vector<8x64xf32>
    %81 = tpu.matmul %76, %80, %cst_36 {dimension_numbers = #tpu.dot_dimension_numbers<[1], [0], [0], [1], [0, 0, 1, 1], [], []>} : vector<8x128xf32>, vector<128x64xf32>, vector<8x64xf32> -> vector<8x64xf32>
    %82 = vector.broadcast %77 : vector<1x64xf32> to vector<8x64xf32>
    %83 = arith.addf %81, %82 : vector<8x64xf32>
    %cst_37 = arith.constant dense<0.000000e+00> : vector<64xf32>
    %84 = vector.multi_reduction <add>, %83, %cst_37 [0] : vector<8x64xf32> to vector<64xf32>
    %85 = vector.shape_cast %84 : vector<64xf32> to vector<1x64xf32>
    %cst_38 = arith.constant 8.000000e+00 : f32
    %86 = vector.broadcast %cst_38 : f32 to vector<1x64xf32>
    %87 = arith.divf %85, %86 : vector<1x64xf32>
    %88 = vector.broadcast %87 : vector<1x64xf32> to vector<8x64xf32>
    %89 = arith.subf %83, %88 : vector<8x64xf32>
    %90 = arith.mulf %89, %89 : vector<8x64xf32>
    %cst_39 = arith.constant dense<0.000000e+00> : vector<64xf32>
    %91 = vector.multi_reduction <add>, %90, %cst_39 [0] : vector<8x64xf32> to vector<64xf32>
    %92 = vector.shape_cast %91 : vector<64xf32> to vector<1x64xf32>
    %cst_40 = arith.constant 8.000000e+00 : f32
    %93 = vector.broadcast %cst_40 : f32 to vector<1x64xf32>
    %94 = arith.divf %92, %93 : vector<1x64xf32>
    %cst_41 = arith.constant 9.99999974E-6 : f32
    %95 = vector.broadcast %cst_41 : f32 to vector<1x64xf32>
    %96 = arith.addf %94, %95 : vector<1x64xf32>
    %97 = math.rsqrt %96 : vector<1x64xf32>
    %98 = arith.mulf %78, %97 : vector<1x64xf32>
    %99 = vector.broadcast %87 : vector<1x64xf32> to vector<8x64xf32>
    %100 = arith.subf %83, %99 : vector<8x64xf32>
    %101 = vector.broadcast %98 : vector<1x64xf32> to vector<8x64xf32>
    %102 = arith.mulf %100, %101 : vector<8x64xf32>
    %103 = vector.broadcast %79 : vector<1x64xf32> to vector<8x64xf32>
    %104 = arith.addf %102, %103 : vector<8x64xf32>
    %cst_42 = arith.constant 0.000000e+00 : f32
    %105 = vector.broadcast %cst_42 : f32 to vector<8x64xf32>
    %106 = arith.cmpf ogt, %104, %105 : vector<8x64xf32>
    %107 = math.exp %104 : vector<8x64xf32>
    %cst_43 = arith.constant 1.000000e+00 : f32
    %108 = vector.broadcast %cst_43 : f32 to vector<8x64xf32>
    %109 = arith.subf %107, %108 : vector<8x64xf32>
    %cst_44 = arith.constant 1.67326319 : f32
    %110 = vector.broadcast %cst_44 : f32 to vector<8x64xf32>
    %111 = arith.mulf %110, %109 : vector<8x64xf32>
    %112 = arith.select %106, %104, %111 : vector<8x64xi1>, vector<8x64xf32>
    %cst_45 = arith.constant 1.05070102 : f32
    %113 = vector.broadcast %cst_45 : f32 to vector<8x64xf32>
    %114 = arith.mulf %113, %112 : vector<8x64xf32>
    %c9 = arith.constant 9 : index
    %c0_46 = arith.constant 0 : index
    %115 = vector.load %arg4[%c9, %c0_46] : memref<16x256xf32, #tpu.memory_space<vmem>>, vector<1x64xf32>
    %c10 = arith.constant 10 : index
    %c0_47 = arith.constant 0 : index
    %116 = vector.load %arg4[%c10, %c0_47] : memref<16x256xf32, #tpu.memory_space<vmem>>, vector<1x1xf32>
    %cst_48 = arith.constant dense<0.000000e+00> : vector<1x8xf32>
    %117 = tpu.matmul %115, %114, %cst_48 {dimension_numbers = #tpu.dot_dimension_numbers<[1], [1], [0], [0], [0, 0, 1, 0], [], []>} : vector<1x64xf32>, vector<8x64xf32>, vector<1x8xf32> -> vector<1x8xf32>
    %118 = vector.broadcast %116 : vector<1x1xf32> to vector<1x8xf32>
    %119 = arith.addf %117, %118 : vector<1x8xf32>
    %120 = arith.negf %119 : vector<1x8xf32>
    %121 = math.exp %120 : vector<1x8xf32>
    %cst_49 = arith.constant 1.000000e+00 : f32
    %122 = vector.broadcast %cst_49 : f32 to vector<1x8xf32>
    %123 = arith.addf %122, %121 : vector<1x8xf32>
    %124 = arith.divf %122, %123 : vector<1x8xf32>
    %c0_50 = arith.constant 0 : index
    %c0_51 = arith.constant 0 : index
    %125 = vector.load %arg5[%c0_50, %c0_51] : memref<1x8xf32, #tpu.memory_space<vmem>>, vector<1x8xf32>
    tpu.vector_store %arg5[%c0_50, %c0_51], %124 {strides = array<i32>} : memref<1x8xf32, #tpu.memory_space<vmem>>, vector<1x8xf32>,
    return
  }
}

</mosaic_0001>

<llo_original>
// kernel: mlp_forward.1
$region0: #{mlp_forward.1}
  #allocation0 [shape = 'u32[]', space=smem, size = 0x4, offset = 0x4, fixed_abs, tag = 'smem constant byte address 0x4 - core index']
  #allocation1 [shape = 'u32[144,128]{1,0:T(1,128)}', space=vmem, size = 0x12000, scoped, tag = 'internal scratch']
  %s0 = inlined_call_operand.vmem [shape: f32[8,32], index: 0, kind: input, shape index: {}]
  %s1 = inlined_call_operand.vmem [shape: f32[32,256], index: 1, kind: input, shape index: {}]
  %s2 = inlined_call_operand.hbm [shape: f32[256,128], index: 2, kind: input, shape index: {}]
  %s3 = inlined_call_operand.vmem [shape: f32[128,64], index: 3, kind: input, shape index: {}]
  %s4 = inlined_call_operand.vmem [shape: f32[16,256], index: 4, kind: input, shape index: {}]
  %s5 = inlined_call_operand.hbm [shape: f32[1,8], index: 5, kind: output, shape index: {}]
  %s6 = sld [smem:[#allocation0]]
  $region34: #{mlp_forward.1} parent=0
    _
  %s8 = ssub.s32 1, %s6
  %s9 = scalar_select 0, %s8, %s6
  $region1: #{mlp_forward.1} parent=0
    #allocation2 [shape = 'u8[131072]{0}', space=vmem, size = 0x20000, scoped, tag = 'input window, operand 2, single buffered']
    #allocation3 [shape = 's32[1]{0}', space=sflag, size = 0x4, scoped, tag = 'scoped memory for mlp_forward.1']
    #allocation4 [shape = 's32[1]{0}', space=sflag, size = 0x4, scoped, tag = 'scoped memory for mlp_forward.1']
    #allocation5 [shape = 'u8[512]{0}', space=vmem, size = 0x400, scoped, tag = 'output window, operand 0, single buffered']
    %10 = vsyncpa [#allocation3], 0
    %11 = vsyncpa [#allocation4], 0
    // Predicated region
    $region2: #{mlp_forward.1} parent=1 // pred_check
      _
    $region3: #{mlp_forward.1} parent=1 // pred_check_branch
      %13 = sbr.rel (0) target = $region5
    $region4: #{mlp_forward.1} parent=1 // pred_region
      _
    $region5: #{mlp_forward.1} parent=1 // pred_fallthru
      _
    // Predicated region
    $region6: #{mlp_forward.1} parent=1 // pred_check
      _
    $region7: #{mlp_forward.1} parent=1 // pred_check_branch
      %15 = sbr.rel (0) target = $region9
    $region8: #{mlp_forward.1} parent=1 // pred_region
      _
    $region9: #{mlp_forward.1} parent=1 // pred_fallthru
      _
    // Predicated region
    $region10: #{mlp_forward.1} parent=1 // pred_check
      _
    $region11: #{mlp_forward.1} parent=1 // pred_check_branch
      %17 = sbr.rel (0) target = $region13
    $region12: #{mlp_forward.1} parent=1 // pred_region
      %s19 = ssub.s32 4096, 4096
      %20 = vsyncadd [#allocation3], %s19
      %s21 = sshll.u32 [#allocation2], 4
      %s22 = int_to_ptr.vmem [resolvable:$true] %s21
      %27 = dma.hbm_to_vmem [thread:$0]  %s2, 4096, %s22, [#allocation3], 128, 128, 8
    $region13: #{mlp_forward.1} parent=1 // pred_fallthru
      _
    // Predicated region
    $region14: #{mlp_forward.1} parent=1 // pred_check
      _
    $region15: #{mlp_forward.1} parent=1 // pred_check_branch
      %29 = sbr.rel (0) target = $region17
    $region16: #{mlp_forward.1} parent=1 // pred_region
      _
    $region17: #{mlp_forward.1} parent=1 // pred_fallthru
      _
    // Predicated region
    $region18: #{mlp_forward.1} parent=1 // pred_check
      _
    $region19: #{mlp_forward.1} parent=1 // pred_check_branch
      %31 = sbr.rel (0) target = $region21
    $region20: #{mlp_forward.1} parent=1 // pred_region
      _
    $region21: #{mlp_forward.1} parent=1 // pred_fallthru
      _
    // Predicated region
    $region22: #{mlp_forward.1} parent=1 // pred_check
      _
    $region23: #{mlp_forward.1} parent=1 // pred_check_branch
      %33 = sbr.rel (0) target = $region25
    $region24: #{mlp_forward.1} parent=1 // pred_region
      %34 = dma.done [#allocation3], 4096
    $region25: #{mlp_forward.1} parent=1 // pred_fallthru
      _
    %v35 = vld [vmem:[%s0] sm:$0xff]
    %v36 = vld [vmem:[%s4] ss:$8 sm:$0x3]
    %s37 = scalar_lea.vmem %s4, 1
    %v38 = vld [vmem:[%s37] ss:$8 sm:$0x3]
    %s39 = scalar_lea.vmem %s4, 2
    %v40 = vld [vmem:[%s39] ss:$8 sm:$0x3]
    %v41 = vld [vmem:[%s1] sm:$0xff]
    %v42 = vld [vmem:[%s1 + $0x8] sm:$0xff]
    %v43 = vld [vmem:[%s1 + $0x10] sm:$0xff]
    %v44 = vld [vmem:[%s1 + $0x18] sm:$0xff]
    %v45 = vld [vmem:[%s1 + $0x20] sm:$0xff]
    %v46 = vld [vmem:[%s1 + $0x28] sm:$0xff]
    %v47 = vld [vmem:[%s1 + $0x30] sm:$0xff]
    %v48 = vld [vmem:[%s1 + $0x38] sm:$0xff]
    %v50 = vlaneseq
    %v51 = vshrl.u32 %v50, 7
    %v52 = vsub.s32 0, %v51
    %v53 = vrot.slane %v36, %v52
    %v54 = vlaneseq
    %v55 = vshrl.u32 %v54, 7
    %v56 = vsub.s32 1, %v55
    %v57 = vrot.slane %v36, %v56
    %vm60 = vcmask 261120
    %v62 = vsel %vm60, %v35, 0
    %64 = vmatprep.subr.mxu0 %v42
    %65 = vmatpush1.msra.mxu0 %v41
    %66 = vmatprep.subr.mxu0 %v44
    %67 = vmatpush1.msra.mxu0 %v43
    %68 = vmatprep.subr.mxu0 %v46
    %69 = vmatpush1.msra.mxu0 %v45
    %70 = vmatprep.subr.mxu0 %v48
    %71 = vmatpush1.msra.mxu0 %v47
    %72 = vmatprep.subr.mxu0 0.0
    %73 = vmatpush1.msra.mxu0 0.0
    %74 = vmatprep.subr.mxu0 0.0
    %75 = vmatpush1.msra.mxu0 0.0
    %76 = vmatprep.subr.mxu0 0.0
    %77 = vmatpush1.msra.mxu0 0.0
    %78 = vmatprep.subr.mxu0 0.0
    %79 = vmatpush1.msra.mxu0 0.0
    %80 = vmatprep.subr.mxu0 0.0
    %81 = vmatpush1.msra.mxu0 0.0
    %82 = vmatprep.subr.mxu0 0.0
    %83 = vmatpush1.msra.mxu0 0.0
    %84 = vmatprep.subr.mxu0 0.0
    %85 = vmatpush1.msra.mxu0 0.0
    %86 = vmatprep.subr.mxu0 0.0
    %87 = vmatpush1.msra.mxu0 0.0
    %88 = vmatprep.subr.mxu0 0.0
    %89 = vmatpush1.msra.mxu0 0.0
    %90 = vmatprep.subr.mxu0 0.0
    %91 = vmatpush1.msra.mxu0 0.0
    %92 = vmatprep.subr.mxu0 0.0
    %93 = vmatpush1.msra.mxu0 0.0
    %94 = vmatprep.subr.mxu0 0.0
    %95 = vmatpush1.msra.mxu0 0.0
    %96 = vmatprep.subr.mxu0 0.0
    %97 = vmatpush1.msra.mxu0 0.0
    %98 = vmatprep.subr.mxu0 0.0
    %99 = vmatpush1.msra.mxu0 0.0
    %100 = vmatprep.subr.mxu0 0.0
    %101 = vmatpush1.msra.mxu0 0.0
    %102 = vmatprep.subr.mxu0 0.0
    %103 = vmatpush1.msra.mxu0 0.0
    %104 = vmatprep.subr.mxu0 0.0
    %105 = vmatpush1.msra.mxu0 0.0
    %106 = vmatprep.subr.mxu0 0.0
    %107 = vmatpush1.msra.mxu0 0.0
    %108 = vmatprep.subr.mxu0 0.0
    %109 = vmatpush1.msra.mxu0 0.0
    %110 = vmatprep.subr.mxu0 0.0
    %111 = vmatpush1.msra.mxu0 0.0
    %112 = vmatprep.subr.mxu0 0.0
    %113 = vmatpush1.msra.mxu0 0.0
    %114 = vmatprep.subr.mxu0 0.0
    %115 = vmatpush1.msra.mxu0 0.0
    %116 = vmatprep.subr.mxu0 0.0
    %117 = vmatpush1.msra.mxu0 0.0
    %118 = vmatprep.subr.mxu0 0.0
    %119 = vmatpush1.msra.mxu0 0.0
    %120 = vmatprep.subr.mxu0 0.0
    %121 = vmatpush1.msra.mxu0 0.0
    %122 = vmatprep.subr.mxu0 0.0
    %123 = vmatpush1.msra.mxu0 0.0
    %124 = vmatprep.subr.mxu0 0.0
    %125 = vmatpush1.msra.mxu0 0.0
    %126 = vmatprep.subr.mxu0 0.0
    %127 = vmatpush1.msra.mxu0 0.0
    %128 = vmatprep.mubr.f32.mxu0 0.0
    %129 = vmatmul.mubr.f32.gmra.mrb[0].mxu0 %v62
    %v130 = vpop.f32.mrb[0].mxu0
    %v131 = vadd.f32 %v53, %v130
    %v132 = vpop.f32.mrb[0].mxu0
    %v133 = vadd.f32 %v57, %v132
    %134 = vdwg.mxu0
    %v135 = vrot.slane %v131, 4
    %v136 = vadd.f32 %v131, %v135
    %v137 = vrot.slane %v136, 2
    %v138 = vadd.f32 %v136, %v137
    %v139 = vrot.slane %v138, 1
    %v140 = vadd.f32 %v138, %v139
    %v141 = vrot.slane %v133, 4
    %v142 = vadd.f32 %v133, %v141
    %v143 = vrot.slane %v142, 2
    %v144 = vadd.f32 %v142, %v143
    %v145 = vrot.slane %v144, 1
    %v146 = vadd.f32 %v144, %v145
    %v147 = vrcp.pop 8.0
    %v148 = vmul.f32 %v140, %v147
    %v149 = vmul.f32 %v146, %v147
    %v150 = vsub.f32 %v131, %v148
    %v151 = vsub.f32 %v133, %v149
    %v152 = vmul.f32 %v150, %v150
    %v153 = vmul.f32 %v151, %v151
    %v154 = vrot.slane %v152, 4
    %v155 = vadd.f32 %v152, %v154
    %v156 = vrot.slane %v155, 2
    %v157 = vadd.f32 %v155, %v156
    %v158 = vrot.slane %v157, 1
    %v159 = vadd.f32 %v157, %v158
    %v160 = vrot.slane %v153, 4
    %v161 = vadd.f32 %v153, %v160
    %v162 = vrot.slane %v161, 2
    %v163 = vadd.f32 %v161, %v162
    %v164 = vrot.slane %v163, 1
    %v165 = vadd.f32 %v163, %v164
    %v166 = vmul.f32 %v159, %v147
    %v167 = vmul.f32 %v165, %v147
    %v168 = vadd.f32 %v166, 1e-05
    %v169 = vadd.f32 %v167, 1e-05
    %v170 = vrsqrt.pop %v168
    %v171 = vrsqrt.pop %v169
    %v174 = vcombine.low %v170, %v171
    %v176 = vunpack.c.l.s4 1966171168
    %v177 = vunpack.c.0.s8 %v176
    %v178 = vlaneseq
    %v179 = vshrl.u32 %v178, 7
    %v180 = vsub.s32 %v177, %v179
    %v181 = vrot.slane %v174, %v180
    %v183 = vunpack.c.l.s4 1966171168
    %v184 = vunpack.c.0.s8 %v183
    %v185 = vlaneseq
    %v186 = vshrl.u32 %v185, 7
    %v187 = vsub.s32 %v184, %v186
    %v188 = vrot.slane %v181, %v187
    %v190 = vmul.f32 %v38, %v188
    %v192 = vlaneseq
    %v193 = vshrl.u32 %v192, 7
    %v194 = vsub.s32 0, %v193
    %v195 = vrot.slane %v190, %v194
    %v196 = vlaneseq
    %v197 = vshrl.u32 %v196, 7
    %v198 = vsub.s32 1, %v197
    %v199 = vrot.slane %v190, %v198
    %v202 = vmul.f32 %v150, %v195
    %v203 = vmul.f32 %v151, %v199
    %v205 = vlaneseq
    %v206 = vshrl.u32 %v205, 7
    %v207 = vsub.s32 0, %v206
    %v208 = vrot.slane %v40, %v207
    %v209 = vlaneseq
    %v210 = vshrl.u32 %v209, 7
    %v211 = vsub.s32 1, %v210
    %v212 = vrot.slane %v40, %v211
    %v215 = vadd.f32 %v202, %v208
    %v216 = vadd.f32 %v203, %v212
    %vm217 = vcmp.gt.f32.partialorder %v215, 0.0
    %vm218 = vcmp.gt.f32.partialorder %v216, 0.0
    %v219 = vmul.f32 %v215, 1.442695
    %v220 = vpow.pop %v219
    %v221 = vmul.f32 %v216, 1.442695
    %v222 = vpow.pop %v221
    %v223 = vsub.f32 %v220, 1.0
    %v224 = vsub.f32 %v222, 1.0
    %v225 = vmul.f32 %v223, 1.6732632
    %v226 = vmul.f32 %v224, 1.6732632
    %v227 = vsel %vm217, %v215, %v225
    %v228 = vsel %vm218, %v216, %v226
    %v229 = vmul.f32 %v227, 1.050701
    %v230 = vmul.f32 %v228, 1.050701
    %v231 = vld [vmem:[%s4 + $0x3] ss:$0 sm:$0xff]
    %v232 = vld [vmem:[%s4 + $0x4] ss:$0 sm:$0xff]
    %v233 = vld [vmem:[%s4 + $0x5] ss:$0 sm:$0xff]
    %v234 = vld [vmem:[#allocation2] sm:$0xff]
    %v235 = vld [vmem:[#allocation2 + $0x8] sm:$0xff]
    %v236 = vld [vmem:[#allocation2 + $0x10] sm:$0xff]
    %v237 = vld [vmem:[#allocation2 + $0x18] sm:$0xff]
    %v238 = vld [vmem:[#allocation2 + $0x20] sm:$0xff]
    %v239 = vld [vmem:[#allocation2 + $0x28] sm:$0xff]
    %v240 = vld [vmem:[#allocation2 + $0x30] sm:$0xff]
    %v241 = vld [vmem:[#allocation2 + $0x38] sm:$0xff]
    %v242 = vld [vmem:[#allocation2 + $0x40] sm:$0xff]
    %v243 = vld [vmem:[#allocation2 + $0x48] sm:$0xff]
    %v244 = vld [vmem:[#allocation2 + $0x50] sm:$0xff]
    %v245 = vld [vmem:[#allocation2 + $0x58] sm:$0xff]
    %v246 = vld [vmem:[#allocation2 + $0x60] sm:$0xff]
    %v247 = vld [vmem:[#allocation2 + $0x68] sm:$0xff]
    %v248 = vld [vmem:[#allocation2 + $0x70] sm:$0xff]
    %v249 = vld [vmem:[#allocation2 + $0x78] sm:$0xff]
    %v250 = vld [vmem:[#allocation2 + $0x80] sm:$0xff]
    %v251 = vld [vmem:[#allocation2 + $0x88] sm:$0xff]
    %v252 = vld [vmem:[#allocation2 + $0x90] sm:$0xff]
    %v253 = vld [vmem:[#allocation2 + $0x98] sm:$0xff]
    %v254 = vld [vmem:[#allocation2 + $0xa0] sm:$0xff]
    %v255 = vld [vmem:[#allocation2 + $0xa8] sm:$0xff]
    %v256 = vld [vmem:[#allocation2 + $0xb0] sm:$0xff]
    %v257 = vld [vmem:[#allocation2 + $0xb8] sm:$0xff]
    %v258 = vld [vmem:[#allocation2 + $0xc0] sm:$0xff]
    %v259 = vld [vmem:[#allocation2 + $0xc8] sm:$0xff]
    %v260 = vld [vmem:[#allocation2 + $0xd0] sm:$0xff]
    %v261 = vld [vmem:[#allocation2 + $0xd8] sm:$0xff]
    %v262 = vld [vmem:[#allocation2 + $0xe0] sm:$0xff]
    %v263 = vld [vmem:[#allocation2 + $0xe8] sm:$0xff]
    %v264 = vld [vmem:[#allocation2 + $0xf0] sm:$0xff]
    %v265 = vld [vmem:[#allocation2 + $0xf8] sm:$0xff]
    %266 = vmatprep.subr.mxu0 0.0
    %267 = vmatpush1.msra.mxu0 %v234
    %268 = vmatprep.subr.mxu0 0.0
    %269 = vmatpush1.msra.mxu0 %v235
    %270 = vmatprep.subr.mxu0 0.0
    %271 = vmatpush1.msra.mxu0 %v236
    %272 = vmatprep.subr.mxu0 0.0
    %273 = vmatpush1.msra.mxu0 %v237
    %274 = vmatprep.subr.mxu0 0.0
    %275 = vmatpush1.msra.mxu0 %v238
    %276 = vmatprep.subr.mxu0 0.0
    %277 = vmatpush1.msra.mxu0 %v239
    %278 = vmatprep.subr.mxu0 0.0
    %279 = vmatpush1.msra.mxu0 %v240
    %280 = vmatprep.subr.mxu0 0.0
    %281 = vmatpush1.msra.mxu0 %v241
    %282 = vmatprep.subr.mxu0 0.0
    %283 = vmatpush1.msra.mxu0 %v242
    %284 = vmatprep.subr.mxu0 0.0
    %285 = vmatpush1.msra.mxu0 %v243
    %286 = vmatprep.subr.mxu0 0.0
    %287 = vmatpush1.msra.mxu0 %v244
    %288 = vmatprep.subr.mxu0 0.0
    %289 = vmatpush1.msra.mxu0 %v245
    %290 = vmatprep.subr.mxu0 0.0
    %291 = vmatpush1.msra.mxu0 %v246
    %292 = vmatprep.subr.mxu0 0.0
    %293 = vmatpush1.msra.mxu0 %v247
    %294 = vmatprep.subr.mxu0 0.0
    %295 = vmatpush1.msra.mxu0 %v248
    %296 = vmatprep.subr.mxu0 0.0
    %297 = vmatpush1.msra.mxu0 %v249
    %298 = vmatprep.subr.mxu0 0.0
    %299 = vmatpush1.msra.mxu0 %v250
    %300 = vmatprep.subr.mxu0 0.0
    %301 = vmatpush1.msra.mxu0 %v251
    %302 = vmatprep.subr.mxu0 0.0
    %303 = vmatpush1.msra.mxu0 %v252
    %304 = vmatprep.subr.mxu0 0.0
    %305 = vmatpush1.msra.mxu0 %v253
    %306 = vmatprep.subr.mxu0 0.0
    %307 = vmatpush1.msra.mxu0 %v254
    %308 = vmatprep.subr.mxu0 0.0
    %309 = vmatpush1.msra.mxu0 %v255
    %310 = vmatprep.subr.mxu0 0.0
    %311 = vmatpush1.msra.mxu0 %v256
    %312 = vmatprep.subr.mxu0 0.0
    %313 = vmatpush1.msra.mxu0 %v257
    %314 = vmatprep.subr.mxu0 0.0
    %315 = vmatpush1.msra.mxu0 %v258
    %316 = vmatprep.subr.mxu0 0.0
    %317 = vmatpush1.msra.mxu0 %v259
    %318 = vmatprep.subr.mxu0 0.0
    %319 = vmatpush1.msra.mxu0 %v260
    %320 = vmatprep.subr.mxu0 0.0
    %321 = vmatpush1.msra.mxu0 %v261
    %322 = vmatprep.subr.mxu0 0.0
    %323 = vmatpush1.msra.mxu0 %v262
    %324 = vmatprep.subr.mxu0 0.0
    %325 = vmatpush1.msra.mxu0 %v263
    %326 = vmatprep.subr.mxu0 0.0
    %327 = vmatpush1.msra.mxu0 %v264
    %328 = vmatprep.subr.mxu0 0.0
    %329 = vmatpush1.msra.mxu0 %v265
    %330 = vmatprep.mubr.f32.mxu0 %v230
    %331 = vmatmul.mubr.f32.gmra.mrb[0].mxu0 %v229
    %v332 = vpop.f32.mrb[0].mxu0
    %v333 = vadd.f32 %v231, %v332
    %v334 = vpop.f32.mrb[0].mxu0
    %335 = vdwg.mxu0
    %v336 = vrot.slane %v333, 4
    %v337 = vadd.f32 %v333, %v336
    %v338 = vrot.slane %v337, 2
    %v339 = vadd.f32 %v337, %v338
    %v340 = vrot.slane %v339, 1
    %v341 = vadd.f32 %v339, %v340
    %v342 = vmul.f32 %v341, %v147
    %v343 = vsub.f32 %v333, %v342
    %v344 = vmul.f32 %v343, %v343
    %v345 = vrot.slane %v344, 4
    %v346 = vadd.f32 %v344, %v345
    %v347 = vrot.slane %v346, 2
    %v348 = vadd.f32 %v346, %v347
    %v349 = vrot.slane %v348, 1
    %v350 = vadd.f32 %v348, %v349
    %v351 = vmul.f32 %v350, %v147
    %v352 = vadd.f32 %v351, 1e-05
    %v353 = vrsqrt.pop %v352
    %v354 = vmul.f32 %v232, %v353
    %v355 = vmul.f32 %v343, %v354
    %v356 = vadd.f32 %v355, %v233
    %vm357 = vcmp.gt.f32.partialorder %v356, 0.0
    %v358 = vmul.f32 %v356, 1.442695
    %v359 = vpow.pop %v358
    %v360 = vsub.f32 %v359, 1.0
    %v361 = vmul.f32 %v360, 1.6732632
    %v362 = vsel %vm357, %v356, %v361
    %v363 = vmul.f32 %v362, 1.050701
    %v364 = vld [vmem:[%s4 + $0x6] ss:$0 sm:$0xff]
    %v365 = vld [vmem:[%s4 + $0x7] ss:$0 sm:$0xff]
    %v366 = vld [vmem:[%s4 + $0x10] ss:$0 sm:$0xff]
    %v367 = vld [vmem:[%s3] sm:$0xff]
    %v368 = vld [vmem:[%s3 + $0x8] sm:$0xff]
    %v369 = vld [vmem:[%s3 + $0x10] sm:$0xff]
    %v370 = vld [vmem:[%s3 + $0x18] sm:$0xff]
    %v371 = vld [vmem:[%s3 + $0x20] sm:$0xff]
    %v372 = vld [vmem:[%s3 + $0x28] sm:$0xff]
    %v373 = vld [vmem:[%s3 + $0x30] sm:$0xff]
    %v374 = vld [vmem:[%s3 + $0x38] sm:$0xff]
    %v375 = vld [vmem:[%s3 + $0x40] sm:$0xff]
    %v376 = vld [vmem:[%s3 + $0x48] sm:$0xff]
    %v377 = vld [vmem:[%s3 + $0x50] sm:$0xff]
    %v378 = vld [vmem:[%s3 + $0x58] sm:$0xff]
    %v379 = vld [vmem:[%s3 + $0x60] sm:$0xff]
    %v380 = vld [vmem:[%s3 + $0x68] sm:$0xff]
    %v381 = vld [vmem:[%s3 + $0x70] sm:$0xff]
    %v382 = vld [vmem:[%s3 + $0x78] sm:$0xff]
    %383 = vmatprep.subr.mxu0 0.0
    %384 = vmatpush1.msra.mxu0 %v367
    %385 = vmatprep.subr.mxu0 0.0
    %386 = vmatpush1.msra.mxu0 %v368
    %387 = vmatprep.subr.mxu0 0.0
    %388 = vmatpush1.msra.mxu0 %v369
    %389 = vmatprep.subr.mxu0 0.0
    %390 = vmatpush1.msra.mxu0 %v370
    %391 = vmatprep.subr.mxu0 0.0
    %392 = vmatpush1.msra.mxu0 %v371
    %393 = vmatprep.subr.mxu0 0.0
    %394 = vmatpush1.msra.mxu0 %v372
    %395 = vmatprep.subr.mxu0 0.0
    %396 = vmatpush1.msra.mxu0 %v373
    %397 = vmatprep.subr.mxu0 0.0
    %398 = vmatpush1.msra.mxu0 %v374
    %399 = vmatprep.subr.mxu0 0.0
    %400 = vmatpush1.msra.mxu0 %v375
    %401 = vmatprep.subr.mxu0 0.0
    %402 = vmatpush1.msra.mxu0 %v376
    %403 = vmatprep.subr.mxu0 0.0
    %404 = vmatpush1.msra.mxu0 %v377
    %405 = vmatprep.subr.mxu0 0.0
    %406 = vmatpush1.msra.mxu0 %v378
    %407 = vmatprep.subr.mxu0 0.0
    %408 = vmatpush1.msra.mxu0 %v379
    %409 = vmatprep.subr.mxu0 0.0
    %410 = vmatpush1.msra.mxu0 %v380
    %411 = vmatprep.subr.mxu0 0.0
    %412 = vmatpush1.msra.mxu0 %v381
    %413 = vmatprep.subr.mxu0 0.0
    %414 = vmatpush1.msra.mxu0 %v382
    %415 = vmatprep.subr.mxu0 0.0
    %416 = vmatpush1.msra.mxu0 0.0
    %417 = vmatprep.subr.mxu0 0.0
    %418 = vmatpush1.msra.mxu0 0.0
    %419 = vmatprep.subr.mxu0 0.0
    %420 = vmatpush1.msra.mxu0 0.0
    %421 = vmatprep.subr.mxu0 0.0
    %422 = vmatpush1.msra.mxu0 0.0
    %423 = vmatprep.subr.mxu0 0.0
    %424 = vmatpush1.msra.mxu0 0.0
    %425 = vmatprep.subr.mxu0 0.0
    %426 = vmatpush1.msra.mxu0 0.0
    %427 = vmatprep.subr.mxu0 0.0
    %428 = vmatpush1.msra.mxu0 0.0
    %429 = vmatprep.subr.mxu0 0.0
    %430 = vmatpush1.msra.mxu0 0.0
    %431 = vmatprep.subr.mxu0 0.0
    %432 = vmatpush1.msra.mxu0 0.0
    %433 = vmatprep.subr.mxu0 0.0
    %434 = vmatpush1.msra.mxu0 0.0
    %435 = vmatprep.subr.mxu0 0.0
    %436 = vmatpush1.msra.mxu0 0.0
    %437 = vmatprep.subr.mxu0 0.0
    %438 = vmatpush1.msra.mxu0 0.0
    %439 = vmatprep.subr.mxu0 0.0
    %440 = vmatpush1.msra.mxu0 0.0
    %441 = vmatprep.subr.mxu0 0.0
    %442 = vmatpush1.msra.mxu0 0.0
    %443 = vmatprep.subr.mxu0 0.0
    %444 = vmatpush1.msra.mxu0 0.0
    %445 = vmatprep.subr.mxu0 0.0
    %446 = vmatpush1.msra.mxu0 0.0
    %447 = vmatprep.mubr.f32.mxu0 0.0
    %448 = vmatmul.mubr.f32.gmra.mrb[0].mxu0 %v363
    %v449 = vpop.f32.mrb[0].mxu0
    %v450 = vadd.f32 %v364, %v449
    %v451 = vpop.f32.mrb[0].mxu0
    %452 = vdwg.mxu0
    %vm453 = vcmask 523264
    %v454 = vsel %vm453, %v450, 0.0
    %v455 = vrot.slane %v454, 4
    %v456 = vadd.f32 %v454, %v455
    %v457 = vrot.slane %v456, 2
    %v458 = vadd.f32 %v456, %v457
    %v459 = vrot.slane %v458, 1
    %v460 = vadd.f32 %v458, %v459
    %v461 = vmul.f32 %v460, %v147
    %v462 = vsub.f32 %v450, %v461
    %v463 = vmul.f32 %v462, %v462
    %v464 = vsel %vm453, %v463, 0.0
    %v465 = vrot.slane %v464, 4
    %v466 = vadd.f32 %v464, %v465
    %v467 = vrot.slane %v466, 2
    %v468 = vadd.f32 %v466, %v467
    %v469 = vrot.slane %v468, 1
    %v470 = vadd.f32 %v468, %v469
    %v471 = vmul.f32 %v470, %v147
    %v472 = vadd.f32 %v471, 1e-05
    %v473 = vrsqrt.pop %v472
    %v474 = vmul.f32 %v365, %v473
    %v475 = vmul.f32 %v462, %v474
    %v476 = vadd.f32 %v475, %v366
    %vm477 = vcmp.gt.f32.partialorder %v476, 0.0
    %v478 = vmul.f32 %v476, 1.442695
    %v479 = vpow.pop %v478
    %v480 = vsub.f32 %v479, 1.0
    %v481 = vmul.f32 %v480, 1.6732632
    %v482 = vsel %vm477, %v476, %v481
    %v483 = vmul.f32 %v482, 1.050701
    %v484 = vld [vmem:[%s4 + $0x11] ss:$0 sm:$0xff]
    %v485 = vld [vmem:[%s4 + $0x12] ss:$0 sm:$0xff]
    %487 = vset.pattern.permute.xlu0 0
    %488 = vperm.xlu0 %487, %v485
    %v489 = vpop.permute.xlu0 %488
    %v492 = vsel %vm453, %v484, 0
    %v495 = vsel %vm453, %v483, 0
    %497 = vmatprep.subr.mxu0 0.0
    %498 = vmatpush1.xpose.msra.mxu0 %v495
    %499 = vmatprep.subr.mxu0 0.0
    %500 = vmatpush1.xpose.msra.mxu0 0.0
    %501 = vmatprep.subr.mxu0 0.0
    %502 = vmatpush1.xpose.msra.mxu0 0.0
    %503 = vmatprep.subr.mxu0 0.0
    %504 = vmatpush1.xpose.msra.mxu0 0.0
    %505 = vmatprep.subr.mxu0 0.0
    %506 = vmatpush1.xpose.msra.mxu0 0.0
    %507 = vmatprep.subr.mxu0 0.0
    %508 = vmatpush1.xpose.msra.mxu0 0.0
    %509 = vmatprep.subr.mxu0 0.0
    %510 = vmatpush1.xpose.msra.mxu0 0.0
    %511 = vmatprep.subr.mxu0 0.0
    %512 = vmatpush1.xpose.msra.mxu0 0.0
    %513 = vmatprep.subr.mxu0 0.0
    %514 = vmatpush1.xpose.msra.mxu0 0.0
    %515 = vmatprep.subr.mxu0 0.0
    %516 = vmatpush1.xpose.msra.mxu0 0.0
    %517 = vmatprep.subr.mxu0 0.0
    %518 = vmatpush1.xpose.msra.mxu0 0.0
    %519 = vmatprep.subr.mxu0 0.0
    %520 = vmatpush1.xpose.msra.mxu0 0.0
    %521 = vmatprep.subr.mxu0 0.0
    %522 = vmatpush1.xpose.msra.mxu0 0.0
    %523 = vmatprep.subr.mxu0 0.0
    %524 = vmatpush1.xpose.msra.mxu0 0.0
    %525 = vmatprep.subr.mxu0 0.0
    %526 = vmatpush1.xpose.msra.mxu0 0.0
    %527 = vmatprep.subr.mxu0 0.0
    %528 = vmatpush1.xpose.msra.mxu0 0.0
    %529 = vmatprep.subr.mxu0 0.0
    %530 = vmatpush1.xpose.msra.mxu0 0.0
    %531 = vmatprep.subr.mxu0 0.0
    %532 = vmatpush1.xpose.msra.mxu0 0.0
    %533 = vmatprep.subr.mxu0 0.0
    %534 = vmatpush1.xpose.msra.mxu0 0.0
    %535 = vmatprep.subr.mxu0 0.0
    %536 = vmatpush1.xpose.msra.mxu0 0.0
    %537 = vmatprep.subr.mxu0 0.0
    %538 = vmatpush1.xpose.msra.mxu0 0.0
    %539 = vmatprep.subr.mxu0 0.0
    %540 = vmatpush1.xpose.msra.mxu0 0.0
    %541 = vmatprep.subr.mxu0 0.0
    %542 = vmatpush1.xpose.msra.mxu0 0.0
    %543 = vmatprep.subr.mxu0 0.0
    %544 = vmatpush1.xpose.msra.mxu0 0.0
    %545 = vmatprep.subr.mxu0 0.0
    %546 = vmatpush1.xpose.msra.mxu0 0.0
    %547 = vmatprep.subr.mxu0 0.0
    %548 = vmatpush1.xpose.msra.mxu0 0.0
    %549 = vmatprep.subr.mxu0 0.0
    %550 = vmatpush1.xpose.msra.mxu0 0.0
    %551 = vmatprep.subr.mxu0 0.0
    %552 = vmatpush1.xpose.msra.mxu0 0.0
    %553 = vmatprep.subr.mxu0 0.0
    %554 = vmatpush1.xpose.msra.mxu0 0.0
    %555 = vmatprep.subr.mxu0 0.0
    %556 = vmatpush1.xpose.msra.mxu0 0.0
    %557 = vmatprep.subr.mxu0 0.0
    %558 = vmatpush1.xpose.msra.mxu0 0.0
    %559 = vmatprep.subr.mxu0 0.0
    %560 = vmatpush1.xpose.msra.mxu0 0.0
    %561 = vmatprep.mubr.f32.mxu0 0.0
    %562 = vmatmul.mubr.f32.gmra.mrb[0].mxu0 %v492
    %v563 = vpop.f32.mrb[0].mxu0
    %v564 = vadd.f32 %v489, %v563
    %v565 = vpop.f32.mrb[0].mxu0
    %566 = vdwg.mxu0
    %v567 = vxor.u32 %v564, 2147483648
    %v568 = vmul.f32 %v567, 1.442695
    %v569 = vpow.pop %v568
    %v570 = vadd.f32 %v569, 1.0
    %v571 = vrcp.pop %v570
    %v572 = vmul.f32 1.0, %v571
    %vm573 = vcmask 57344
    %574 = vst.msk [vmem:[#allocation5] sm:$0x1] %vm573, %v572
    // Predicated region
    $region26: #{mlp_forward.1} parent=1 // pred_check
      _
    $region27: #{mlp_forward.1} parent=1 // pred_check_branch
      %576 = sbr.rel (0) target = $region29
    $region28: #{mlp_forward.1} parent=1 // pred_region
      %s578 = ssub.s32 16, 16
      %579 = vsyncadd [#allocation4], %s578
      %s581 = sshll.u32 [#allocation5], 4
      %s582 = int_to_ptr.vmem [resolvable:$true] %s581
      %584 = dma.vmem_to_hbm [thread:$0]  %s582, 16, %s5, [#allocation4]
    $region29: #{mlp_forward.1} parent=1 // pred_fallthru
      _
    // Predicated region
    $region30: #{mlp_forward.1} parent=1 // pred_check
      _
    $region31: #{mlp_forward.1} parent=1 // pred_check_branch
      %586 = sbr.rel (0) target = $region33
    $region32: #{mlp_forward.1} parent=1 // pred_region
      %587 = dma.done [#allocation4], 16
    $region33: #{mlp_forward.1} parent=1 // pred_fallthru
      _
    %588 = vsyncpa [#allocation3], 1
    %589 = vsyncpa [#allocation4], 1

</llo_original>
